<compile_context>
chip_gen: v7x
topology: tpu7x:2x2x1
jax: 0.10.0
libtpu: 0.0.40
codegen_flags: <defaults>
</compile_context>

<pallas_src>
import jax
import jax.numpy as jnp
from jax.experimental import pallas as pl
from jax.experimental.pallas import tpu as pltpu


def _usample_kernel(w_ref, b_ref, x_ref, o_ref):
    # w_ref: SMEM (12,) f32 -- flattened (c, di, dj): index = c*4 + di*2 + dj
    # b_ref: SMEM (1,)  f32
    # x_ref: VMEM (3, th, W)    f32   (batch dim squeezed by BlockSpec)
    # o_ref: VMEM (3, th, 4*W)  f32   (lane-dense view: out rows 2i, 2i+1 concat)
    x0 = x_ref[0]
    x1 = x_ref[1]
    x2 = x_ref[2]
    th, W = x0.shape

    # Hoist all scalar reads once (JAX does not CSE the re-broadcasts).
    w = [w_ref[k] for k in range(12)]
    b = b_ref[0]

    def tap(k):  # k = di*2 + dj
        return x0 * w[k] + x1 * w[4 + k] + x2 * w[8 + k] + b

    t00, t01, t10, t11 = tap(0), tap(1), tap(2), tap(3)

    # Lane (column) interleave: out2d[2i+di, 2j+dj] = tap(di,dj)[i, j]
    row0 = jnp.stack([t00, t01], axis=-1).reshape(th, 2 * W)   # out2d row 2i
    row1 = jnp.stack([t10, t11], axis=-1).reshape(th, 2 * W)   # out2d row 2i+1
    slab = jnp.concatenate([row0, row1], axis=-1)              # (th, 4W) lane-dense

    # The three ConvTranspose2d applications share one layer instance (same
    # weights AND bias), so the three output channels are identical.
    # TODO(synk): if consumers accepted a single-channel (broadcastable) output,
    # 2/3 of the HBM write traffic could be dropped (contract-level change).
    o_ref[0] = slab
    o_ref[1] = slab
    o_ref[2] = slab


def _vmem_capacity_bytes():
    """Physical VMEM per TensorCore; conservative fallback if unavailable."""
    try:
        info = pltpu.get_tpu_info()
        cap = getattr(info, "vmem_capacity_bytes", None)
        if cap:
            return int(cap)
    except Exception:
        pass
    return 64 * 1024 * 1024  # v7x per-TC size (safe lower bound)


def _pick_row_tile(H, W, tile_budget_bytes):
    """Input rows per grid step: multiple of 8, large, VMEM-bounded."""
    # Per input row (f32): double-buffered input (3W) + output (12W) blocks,
    # plus single-buffered in-kernel temporaries (4 taps + row0/row1 + slab ~12W).
    bytes_per_row = ((3 * W + 12 * W) * 2 + 12 * W) * 4
    th = tile_budget_bytes // max(bytes_per_row, 1)
    # Keep >= ~8 row steps when H allows so pipelining / megacore stay busy.
    th = min(th, 1024, max(8, (H // 8) // 8 * 8))
    th = max(8, (th // 8) * 8)
    if th >= H:
        return H  # single full-extent block (always a legal block shape)
    return th


def usample_forward(x, weight, bias):
    """
    x:      (N, 3, H, W)  float32  (NCHW, as in PyTorch)
    weight: (3, 1, 2, 2)  float32  (ConvTranspose2d weight layout)
    bias:   (1,)          float32
    returns (N, 3, 2H, 2W) float32
    """
    N, C, H, W = x.shape
    assert C == 3 and weight.shape == (3, 1, 2, 2) and bias.shape == (1,)

    x = x.astype(jnp.float32)
    w_flat = weight.astype(jnp.float32).reshape(12)  # (c, di, dj) row-major
    b = bias.astype(jnp.float32)

    vmem_cap = _vmem_capacity_bytes()
    # Scoped-VMEM limit for Mosaic (leave headroom for internal scratch),
    # and the fraction of it we let the double-buffered working set use.
    vmem_limit = min((vmem_cap * 3) // 4, 96 * 1024 * 1024)
    tile_budget = min((vmem_cap * 45) // 100, 64 * 1024 * 1024)

    th = _pick_row_tile(H, W, tile_budget)
    grid = (N, pl.cdiv(H, th))  # tail rows handled by Pallas block masking

    out = pl.pallas_call(
        _usample_kernel,
        # Lane-dense output view: (N, 3, H, 4W) is the row-major-contiguous
        # reshape of (N, 3, 2H, 2W) (output rows 2i and 2i+1 are adjacent).
        out_shape=jax.ShapeDtypeStruct((N, 3, H, 4 * W), jnp.float32),
        grid_spec=pltpu.PrefetchScalarGridSpec(
            num_scalar_prefetch=2,  # w_flat, b -> SMEM scalars
            grid=grid,
            in_specs=[
                pl.BlockSpec((None, 3, th, W),
                             lambda n, i, w_r, b_r: (n, 0, i, 0)),
            ],
            out_specs=pl.BlockSpec((None, 3, th, 4 * W),
                                   lambda n, i, w_r, b_r: (n, 0, i, 0)),
        ),
        compiler_params=pltpu.CompilerParams(
            dimension_semantics=("parallel", "parallel"),
            vmem_limit_bytes=int(vmem_limit),
        ),
    )(w_flat, b, x)

    # Free (contiguous) reshape back to NCHW (N, 3, 2H, 2W).
    return out.reshape(N, 3, 2 * H, 2 * W)


# --------------------------- pure-JAX reference ------------------------------
def _reference(x, weight, bias):
    # PyTorch ConvTranspose2d(k=2, s=2), no kernel flip:
    #   out[n, 2i+di, 2j+dj] = sum_c x[n, c, i, j] * w[c, 0, di, dj] + b
    N, C, H, W = x.shape
    w = weight[:, 0]                                      # (3, 2, 2)
    y = jnp.einsum("nchw,cde->nhdwe", x, w) + bias[0]     # (N, H, 2, W, 2)
    y = y.reshape(N, 2 * H, 2 * W)
    return jnp.broadcast_to(y[:, None], (N, 3, 2 * H, 2 * W))


def _check(x, weight, bias):
    out = jax.block_until_ready(usample_forward(x, weight, bias))
    ref = jax.block_until_ready(_reference(x, weight, bias))
    assert out.shape == ref.shape, (out.shape, ref.shape)
    err = float(jnp.max(jnp.abs(out - ref)))
    assert jnp.allclose(out, ref, atol=1e-5, rtol=1e-5), err


if __name__ == "__main__":
    key = jax.random.PRNGKey(0)
    kx, kw, kb, kx2 = jax.random.split(key, 4)

    C = 3
    # PyTorch-style init: U(-b, b) with b = 1/sqrt(fan_in)
    bound = 1.0 / (C * 2 * 2) ** 0.5
    weight = jax.random.uniform(kw, (3, 1, 2, 2), jnp.float32, -bound, bound)
    bias = jax.random.uniform(kb, (1,), jnp.float32, -bound, bound)

    # Main case (module's intended shape regime).
    x = jax.random.normal(kx, (2, C, 16, 16), dtype=jnp.float32)
    _check(x, weight, bias)

    # Tail case: H not a multiple of the row tile, narrow W (masked writeback).
    x2 = jax.random.normal(kx2, (1, C, 20, 12), dtype=jnp.float32)
    _check(x2, weight, bias)

    print("KERNEL_OK")
</pallas_src>

<mosaic_0001>
module attributes {stable_mosaic.version = 11 : i64} {
  func.func @_usample_kernel(%arg0: i32, %arg1: i32, %arg2: memref<12xf32, #tpu.memory_space<smem>>, %arg3: memref<1xf32, #tpu.memory_space<smem>>, %arg4: memref<1x3x8x16xf32, #tpu.memory_space<vmem>>, %arg5: memref<1x3x8x64xf32, #tpu.memory_space<vmem>>) attributes {dimension_semantics = [#tpu.dimension_semantics<parallel>, #tpu.dimension_semantics<parallel>], iteration_bounds = array<i64: 2, 2>, scalar_prefetch = 2 : i64, scratch_operands = 0 : i64, tpu.core_type = #tpu.core_type<tc>, window_params = [{transform_indices = @transform_0, window_bounds = array<i64: 1, 3, 8, 16>}, {transform_indices = @transform_1, window_bounds = array<i64: 1, 3, 8, 64>}]} {
    %c0 = arith.constant 0 : index
    %c0_0 = arith.constant 0 : index
    %c0_1 = arith.constant 0 : index
    %c0_2 = arith.constant 0 : index
    %0 = vector.load %arg4[%c0, %c0_0, %c0_1, %c0_2] : memref<1x3x8x16xf32, #tpu.memory_space<vmem>>, vector<1x1x8x16xf32>
    %1 = vector.shape_cast %0 : vector<1x1x8x16xf32> to vector<8x16xf32>
    %c0_3 = arith.constant 0 : index
    %c1 = arith.constant 1 : index
    %c0_4 = arith.constant 0 : index
    %c0_5 = arith.constant 0 : index
    %2 = vector.load %arg4[%c0_3, %c1, %c0_4, %c0_5] : memref<1x3x8x16xf32, #tpu.memory_space<vmem>>, vector<1x1x8x16xf32>
    %3 = vector.shape_cast %2 : vector<1x1x8x16xf32> to vector<8x16xf32>
    %c0_6 = arith.constant 0 : index
    %c2 = arith.constant 2 : index
    %c0_7 = arith.constant 0 : index
    %c0_8 = arith.constant 0 : index
    %4 = vector.load %arg4[%c0_6, %c2, %c0_7, %c0_8] : memref<1x3x8x16xf32, #tpu.memory_space<vmem>>, vector<1x1x8x16xf32>
    %5 = vector.shape_cast %4 : vector<1x1x8x16xf32> to vector<8x16xf32>
    %c0_9 = arith.constant 0 : index
    %6 = memref.load %arg2[%c0_9] : memref<12xf32, #tpu.memory_space<smem>>
    %c1_10 = arith.constant 1 : index
    %7 = memref.load %arg2[%c1_10] : memref<12xf32, #tpu.memory_space<smem>>
    %c2_11 = arith.constant 2 : index
    %8 = memref.load %arg2[%c2_11] : memref<12xf32, #tpu.memory_space<smem>>
    %c3 = arith.constant 3 : index
    %9 = memref.load %arg2[%c3] : memref<12xf32, #tpu.memory_space<smem>>
    %c4 = arith.constant 4 : index
    %10 = memref.load %arg2[%c4] : memref<12xf32, #tpu.memory_space<smem>>
    %c5 = arith.constant 5 : index
    %11 = memref.load %arg2[%c5] : memref<12xf32, #tpu.memory_space<smem>>
    %c6 = arith.constant 6 : index
    %12 = memref.load %arg2[%c6] : memref<12xf32, #tpu.memory_space<smem>>
    %c7 = arith.constant 7 : index
    %13 = memref.load %arg2[%c7] : memref<12xf32, #tpu.memory_space<smem>>
    %c8 = arith.constant 8 : index
    %14 = memref.load %arg2[%c8] : memref<12xf32, #tpu.memory_space<smem>>
    %c9 = arith.constant 9 : index
    %15 = memref.load %arg2[%c9] : memref<12xf32, #tpu.memory_space<smem>>
    %c10 = arith.constant 10 : index
    %16 = memref.load %arg2[%c10] : memref<12xf32, #tpu.memory_space<smem>>
    %c11 = arith.constant 11 : index
    %17 = memref.load %arg2[%c11] : memref<12xf32, #tpu.memory_space<smem>>
    %c0_12 = arith.constant 0 : index
    %18 = memref.load %arg3[%c0_12] : memref<1xf32, #tpu.memory_space<smem>>
    %19 = vector.broadcast %6 : f32 to vector<8x16xf32>
    %20 = arith.mulf %1, %19 : vector<8x16xf32>
    %21 = vector.broadcast %10 : f32 to vector<8x16xf32>
    %22 = arith.mulf %3, %21 : vector<8x16xf32>
    %23 = arith.addf %20, %22 : vector<8x16xf32>
    %24 = vector.broadcast %14 : f32 to vector<8x16xf32>
    %25 = arith.mulf %5, %24 : vector<8x16xf32>
    %26 = arith.addf %23, %25 : vector<8x16xf32>
    %27 = vector.broadcast %18 : f32 to vector<8x16xf32>
    %28 = arith.addf %26, %27 : vector<8x16xf32>
    %29 = vector.broadcast %7 : f32 to vector<8x16xf32>
    %30 = arith.mulf %1, %29 : vector<8x16xf32>
    %31 = vector.broadcast %11 : f32 to vector<8x16xf32>
    %32 = arith.mulf %3, %31 : vector<8x16xf32>
    %33 = arith.addf %30, %32 : vector<8x16xf32>
    %34 = vector.broadcast %15 : f32 to vector<8x16xf32>
    %35 = arith.mulf %5, %34 : vector<8x16xf32>
    %36 = arith.addf %33, %35 : vector<8x16xf32>
    %37 = vector.broadcast %18 : f32 to vector<8x16xf32>
    %38 = arith.addf %36, %37 : vector<8x16xf32>
    %39 = vector.broadcast %8 : f32 to vector<8x16xf32>
    %40 = arith.mulf %1, %39 : vector<8x16xf32>
    %41 = vector.broadcast %12 : f32 to vector<8x16xf32>
    %42 = arith.mulf %3, %41 : vector<8x16xf32>
    %43 = arith.addf %40, %42 : vector<8x16xf32>
    %44 = vector.broadcast %16 : f32 to vector<8x16xf32>
    %45 = arith.mulf %5, %44 : vector<8x16xf32>
    %46 = arith.addf %43, %45 : vector<8x16xf32>
    %47 = vector.broadcast %18 : f32 to vector<8x16xf32>
    %48 = arith.addf %46, %47 : vector<8x16xf32>
    %49 = vector.broadcast %9 : f32 to vector<8x16xf32>
    %50 = arith.mulf %1, %49 : vector<8x16xf32>
    %51 = vector.broadcast %13 : f32 to vector<8x16xf32>
    %52 = arith.mulf %3, %51 : vector<8x16xf32>
    %53 = arith.addf %50, %52 : vector<8x16xf32>
    %54 = vector.broadcast %17 : f32 to vector<8x16xf32>
    %55 = arith.mulf %5, %54 : vector<8x16xf32>
    %56 = arith.addf %53, %55 : vector<8x16xf32>
    %57 = vector.broadcast %18 : f32 to vector<8x16xf32>
    %58 = arith.addf %56, %57 : vector<8x16xf32>
    %59 = vector.shape_cast %28 : vector<8x16xf32> to vector<8x16x1xf32>
    %60 = vector.shape_cast %38 : vector<8x16xf32> to vector<8x16x1xf32>
    %61 = tpu.concatenate %59, %60 in 2 : vector<8x16x1xf32>, vector<8x16x1xf32> -> vector<8x16x2xf32>
    %62 = vector.shape_cast %61 : vector<8x16x2xf32> to vector<8x32xf32>
    %63 = vector.shape_cast %48 : vector<8x16xf32> to vector<8x16x1xf32>
    %64 = vector.shape_cast %58 : vector<8x16xf32> to vector<8x16x1xf32>
    %65 = tpu.concatenate %63, %64 in 2 : vector<8x16x1xf32>, vector<8x16x1xf32> -> vector<8x16x2xf32>
    %66 = vector.shape_cast %65 : vector<8x16x2xf32> to vector<8x32xf32>
    %67 = tpu.concatenate %62, %66 in 1 : vector<8x32xf32>, vector<8x32xf32> -> vector<8x64xf32>
    %c0_13 = arith.constant 0 : index
    %c0_14 = arith.constant 0 : index
    %c0_15 = arith.constant 0 : index
    %c0_16 = arith.constant 0 : index
    %68 = vector.load %arg5[%c0_13, %c0_14, %c0_15, %c0_16] : memref<1x3x8x64xf32, #tpu.memory_space<vmem>>, vector<1x1x8x64xf32>
    %69 = vector.shape_cast %68 : vector<1x1x8x64xf32> to vector<8x64xf32>
    %70 = vector.shape_cast %67 : vector<8x64xf32> to vector<1x1x8x64xf32>
    tpu.vector_store %arg5[%c0_13, %c0_14, %c0_15, %c0_16], %70 {strides = array<i32>} : memref<1x3x8x64xf32, #tpu.memory_space<vmem>>, vector<1x1x8x64xf32>,
    %c0_17 = arith.constant 0 : index
    %c1_18 = arith.constant 1 : index
    %c0_19 = arith.constant 0 : index
    %c0_20 = arith.constant 0 : index
    %71 = vector.load %arg5[%c0_17, %c1_18, %c0_19, %c0_20] : memref<1x3x8x64xf32, #tpu.memory_space<vmem>>, vector<1x1x8x64xf32>
    %72 = vector.shape_cast %71 : vector<1x1x8x64xf32> to vector<8x64xf32>
    %73 = vector.shape_cast %67 : vector<8x64xf32> to vector<1x1x8x64xf32>
    tpu.vector_store %arg5[%c0_17, %c1_18, %c0_19, %c0_20], %73 {strides = array<i32>} : memref<1x3x8x64xf32, #tpu.memory_space<vmem>>, vector<1x1x8x64xf32>,
    %c0_21 = arith.constant 0 : index
    %c2_22 = arith.constant 2 : index
    %c0_23 = arith.constant 0 : index
    %c0_24 = arith.constant 0 : index
    %74 = vector.load %arg5[%c0_21, %c2_22, %c0_23, %c0_24] : memref<1x3x8x64xf32, #tpu.memory_space<vmem>>, vector<1x1x8x64xf32>
    %75 = vector.shape_cast %74 : vector<1x1x8x64xf32> to vector<8x64xf32>
    %76 = vector.shape_cast %67 : vector<8x64xf32> to vector<1x1x8x64xf32>
    tpu.vector_store %arg5[%c0_21, %c2_22, %c0_23, %c0_24], %76 {strides = array<i32>} : memref<1x3x8x64xf32, #tpu.memory_space<vmem>>, vector<1x1x8x64xf32>,
    return
  }
  func.func @transform_0(%arg0: i32, %arg1: i32, %arg2: memref<12xf32, #tpu.memory_space<smem>>, %arg3: memref<1xf32, #tpu.memory_space<smem>>) -> (i32, i32, i32, i32) {
    %c0_i32 = arith.constant 0 : i32
    %c0_i32_0 = arith.constant 0 : i32
    %c0_i32_1 = arith.constant 0 : i32
    return %arg0, %c0_i32, %arg1, %c0_i32_0 : i32, i32, i32, i32
  }
  func.func @transform_1(%arg0: i32, %arg1: i32, %arg2: memref<12xf32, #tpu.memory_space<smem>>, %arg3: memref<1xf32, #tpu.memory_space<smem>>) -> (i32, i32, i32, i32) {
    %c0_i32 = arith.constant 0 : i32
    %c0_i32_0 = arith.constant 0 : i32
    %c0_i32_1 = arith.constant 0 : i32
    return %arg0, %c0_i32, %arg1, %c0_i32_0 : i32, i32, i32, i32
  }
}

</mosaic_0001>

<llo_original>
// kernel: tpu_custom_call.1
$region0: #{tpu_custom_call.1}
  #allocation0 [shape = 'u32[]', space=smem, size = 0x4, offset = 0x4, fixed_abs, tag = 'smem constant byte address 0x4 - core index']
  #allocation1 [shape = 'u32[144,128]{1,0:T(1,128)}', space=vmem, size = 0x12000, scoped, tag = 'internal scratch']
  #allocation2 [shape = 's32[1]{0}', space=sflag, size = 0x4, scoped, tag = 'scoped memory for tpu_custom_call.1']
  #allocation3 [shape = 'u8[512]{0}', space=smem, size = 0x200, scoped, tag = 'prefetched SMEM operand 0']
  #allocation4 [shape = 'f32[1]{0:T(128)S(6)}', space=smem, size = 0x200, scoped, tag = 'prefetched SMEM operand 1']
  %s0 = inlined_call_operand.vmem [shape: f32[12], index: 0, kind: input, shape index: {}]
  %s1 = inlined_call_operand.<no memory space> [shape: f32[1], index: 1, kind: input, shape index: {}]
  %s2 = inlined_call_operand.hbm [shape: f32[2,3,16,16], index: 2, kind: input, shape index: {}]
  %s3 = inlined_call_operand.hbm [shape: f32[2,3,16,64], index: 3, kind: output, shape index: {}]
  %s4 = sld [smem:[#allocation0]]
  $region41: #{tpu_custom_call.1} parent=0
    _
  %s6 = ssub.s32 1, %s4
  %s7 = scalar_select 0, %s6, %s4
  %s8 = sshll.u32 %s0, 4
  %s9 = int_to_ptr.vmem [resolvable:$true] %s8
  %11 = dma.vmem_to_smem %s9, 16, [#allocation3], [#allocation2]
  %12 = sst [smem:[#allocation4]] %s1
  %13 = dma.done [#allocation2], 16
  %14 = sfence
  $region1: #{tpu_custom_call.1} parent=0
    #allocation5 [shape = 'u8[24576]{0}', space=vmem, size = 0x6000, scoped, tag = 'input window, operand 2']
    #allocation6 [shape = 's32[2]{0}', space=sflag, size = 0x8, scoped, tag = 'scoped memory for tpu_custom_call.1']
    #allocation7 [shape = 's32[2]{0}', space=sflag, size = 0x8, scoped, tag = 'scoped memory for tpu_custom_call.1']
    #allocation8 [shape = 'u8[24576]{0}', space=vmem, size = 0x6000, scoped, tag = 'output window, operand 0']
    %15 = vsyncpa [#allocation6], 0
    %s16 = scalar_lea.sflag [#allocation6], 1
    %17 = vsyncpa %s16, 0
    %18 = vsyncpa [#allocation7], 0
    %s19 = scalar_lea.sflag [#allocation7], 1
    %20 = vsyncpa %s19, 0
    loop: start=0, step=1, limit=6
    $region2: #{tpu_custom_call.1} parent=1 // loop_pre_header
      _
    $region3: #{tpu_custom_call.1} parent=1 // loop_header
      %s22 = sphi 0, %s26
      %p23 = scmp.ge.s32.totalorder %s22, 6
      %s29 = sphi 0, %s41
      %s30 = sphi 0, %s37
      %s31 = sphi 0, %s29
      %s32 = sphi 0, %s30
      %s33 = sphi 0, %s31
      %s34 = sphi 0, %s32
      %s46 = sphi 0, %s48
      %s49 = sphi 0, %s46
      %s50 = sphi 0, %s49
      %s66 = sphi 0, %s50
      %s74 = sphi 0, %s76
      %s77 = sphi 0, %s74
      %s78 = sphi 0, %s77
      %s94 = sphi 0, %s78
    $region4: #{tpu_custom_call.1} parent=1 // loop_header_branch
      %25 = sbr.rel (%p23) target = $region8
    $region5: #{tpu_custom_call.1} parent=1 // loop_body
      %s27 = ssub.s32 %s22, 1
      %s28 = ssub.s32 %s22, 2
      %s35 = sadd.s32 1, %s30
      %p36 = scmp.ge.s32.totalorder %s35, 2
      %s37 = scalar_select %p36, 0, %s35
      %s38 = sadd.s32 1, %s29
      %s39 = scalar_select %p36, %s38, %s29
      %p40 = scmp.ge.s32.totalorder %s39, 2
      %s41 = scalar_select %p40, 0, %s39
      %s42 = ssub.s32 %s29, %s41
      %s43 = ssub.s32 %s30, %s37
      %s44 = sor.u32 %s42, %s43
      %p45 = scmp.eq.s32.totalorder %s44, 0
      %s47 = sadd.s32 %s46, 1
      %s48 = scalar_select %p45, %s46, %s47
      %p51 = pneg %p45
      %p52 = scmp.eq.s32.totalorder %s22, 3
      %p53 = por %p51, %p52
      %p54 = scmp.ne.s32.totalorder %s46, %s49
      %p55 = scmp.eq.s32.totalorder %s22, 0
      %p56 = por %p54, %p55
      %p57 = scmp.ne.s32.totalorder %s46, %s49
      %p58 = scmp.eq.s32.totalorder %s27, 3
      %p59 = por %p57, %p58
      %p60 = scmp.ne.s32.totalorder %s49, %s50
      %p61 = scmp.eq.s32.totalorder %s27, 0
      %p62 = por %p60, %p61
      %p63 = scmp.ne.s32.totalorder %s49, %s50
      %p64 = scmp.eq.s32.totalorder %s28, 3
      %p65 = por %p63, %p64
      %p67 = scmp.ne.s32.totalorder %s50, %s66
      %p68 = scmp.eq.s32.totalorder %s28, 0
      %p69 = por %p67, %p68
      %s70 = ssub.s32 %s29, %s41
      %s71 = ssub.s32 %s30, %s37
      %s72 = sor.u32 %s70, %s71
      %p73 = scmp.eq.s32.totalorder %s72, 0
      %s75 = sadd.s32 %s74, 1
      %s76 = scalar_select %p73, %s74, %s75
      %p79 = pneg %p73
      %p80 = scmp.eq.s32.totalorder %s22, 3
      %p81 = por %p79, %p80
      %p82 = scmp.ne.s32.totalorder %s74, %s77
      %p83 = scmp.eq.s32.totalorder %s22, 0
      %p84 = por %p82, %p83
      %p85 = scmp.ne.s32.totalorder %s74, %s77
      %p86 = scmp.eq.s32.totalorder %s27, 3
      %p87 = por %p85, %p86
      %p88 = scmp.ne.s32.totalorder %s77, %s78
      %p89 = scmp.eq.s32.totalorder %s27, 0
      %p90 = por %p88, %p89
      %p91 = scmp.ne.s32.totalorder %s77, %s78
      %p92 = scmp.eq.s32.totalorder %s28, 3
      %p93 = por %p91, %p92
      %p95 = scmp.ne.s32.totalorder %s78, %s94
      %p96 = scmp.eq.s32.totalorder %s28, 0
      %p97 = por %p95, %p96
      %p98 = scmp.le.s32.totalorder 1, %s22
      %p99 = scmp.lt.s32.totalorder %s22, 5
      %p100 = pnand %p98, %p99
      %p101 = pneg %p100
      // Predicated region
      $region9: #{tpu_custom_call.1} parent=5 // pred_check
        _
      $region10: #{tpu_custom_call.1} parent=5 // pred_check_branch
        %103 = sbr.rel (%p100) target = $region12
      $region11: #{tpu_custom_call.1} parent=5 // pred_region
        %s104 = ssub.s32 %s22, 1
      $region12: #{tpu_custom_call.1} parent=5 // pred_fallthru
        _
      %p105 = scmp.lt.s32.totalorder %s22, 4
      // Predicated region
      $region13: #{tpu_custom_call.1} parent=5 // pred_check
        %p106 = pneg %p105
      $region14: #{tpu_custom_call.1} parent=5 // pred_check_branch
        %108 = sbr.rel (%p106) target = $region16
      $region15: #{tpu_custom_call.1} parent=5 // pred_region
        // Predicated region
        $region17: #{tpu_custom_call.1} parent=15 // pred_check
          %p109 = pneg %p56
        $region18: #{tpu_custom_call.1} parent=15 // pred_check_branch
          %111 = sbr.rel (%p109) target = $region20
        $region19: #{tpu_custom_call.1} parent=15 // pred_region
          %s112 = sand.u32 %s46, 1
          %s113 = scalar_lea.sflag [#allocation6], %s112
          %s114 = sand.u32 %s46, 1
          %s115 = smul.addr %s114, 24
          %s116 = scalar_lea.vmem [#allocation5], %s115
          %s118 = ssub.s32 384, 384
          %119 = vsyncadd %s113, %s118
          %s120 = smul.addr %s29, 6
          %s121 = sadd.s32 %s30, %s120
          %s122 = smul.addr %s121, 128
          %s123 = scalar_lea.hbm %s2, %s122
          %s124 = sshll.u32 %s116, 4
          %s125 = int_to_ptr.vmem [resolvable:$true] %s124
          %130 = dma.hbm_to_vmem [thread:$0]  %s123, 384, %s125, %s113, 256, 128, 8
        $region20: #{tpu_custom_call.1} parent=15 // pred_fallthru
          _
      $region16: #{tpu_custom_call.1} parent=5 // pred_fallthru
        _
      %p131 = scmp.le.s32.totalorder 1, %s22
      %p132 = scmp.lt.s32.totalorder %s22, 5
      %p133 = pnand %p131, %p132
      %p134 = pneg %p133
      // Predicated region
      $region21: #{tpu_custom_call.1} parent=5 // pred_check
        _
      $region22: #{tpu_custom_call.1} parent=5 // pred_check_branch
        %136 = sbr.rel (%p133) target = $region24
      $region23: #{tpu_custom_call.1} parent=5 // pred_region
        %s137 = ssub.s32 %s22, 1
        %s138 = sand.u32 %s49, 1
        %s139 = scalar_lea.sflag [#allocation6], %s138
        %s140 = sand.u32 %s49, 1
        %s141 = smul.addr %s140, 24
        %s142 = scalar_lea.vmem [#allocation5], %s141
        // Predicated region
        $region25: #{tpu_custom_call.1} parent=23 // pred_check
          %p143 = pneg %p62
        $region26: #{tpu_custom_call.1} parent=23 // pred_check_branch
          %145 = sbr.rel (%p143) target = $region28
        $region27: #{tpu_custom_call.1} parent=23 // pred_region
          %146 = dma.done %s139, 384
        $region28: #{tpu_custom_call.1} parent=23 // pred_fallthru
          _
        %s147 = sand.u32 %s49, 1
        %s148 = scalar_lea.sflag [#allocation6], %s147
        %s149 = sand.u32 %s49, 1
        %s150 = smul.addr %s149, 24
        %s151 = scalar_lea.vmem [#allocation5], %s150
        %p152 = pneg %p62
        %p153 = pneg %p59
        %p154 = pneg %p90
        %p155 = pneg %p87
        %s156 = sand.u32 %s77, 1
        %s157 = scalar_lea.sflag [#allocation7], %s156
        %s158 = sand.u32 %s77, 1
        %s159 = smul.addr %s158, 24
        %s160 = scalar_lea.vmem [#allocation8], %s159
        %v161 = vld [vmem:[%s142] sm:$0xff]
        %s162 = scalar_lea.vmem %s142, 8 [#allocation5]
        %v163 = vld [vmem:[%s162] sm:$0xff]
        %s164 = scalar_lea.vmem %s142, 16 [#allocation5]
        %v165 = vld [vmem:[%s164] sm:$0xff]
        %s166 = sld [smem:[#allocation3]]
        %s167 = sld [smem:[#allocation3 + $0x1]]
        %s168 = sld [smem:[#allocation3 + $0x2]]
        %s169 = sld [smem:[#allocation3 + $0x3]]
        %s170 = sld [smem:[#allocation3 + $0x4]]
        %s171 = sld [smem:[#allocation3 + $0x5]]
        %s172 = sld [smem:[#allocation3 + $0x6]]
        %s173 = sld [smem:[#allocation3 + $0x7]]
        %s174 = sld [smem:[#allocation3 + $0x8]]
        %s175 = sld [smem:[#allocation3 + $0x9]]
        %s176 = sld [smem:[#allocation3 + $0xa]]
        %s177 = sld [smem:[#allocation3 + $0xb]]
        %s178 = sld [smem:[#allocation4]]
        %v179 = vstv %s166
        %v180 = vmul.f32 %v161, %v179
        %v181 = vstv %s170
        %v182 = vmul.f32 %v163, %v181
        %v183 = vadd.f32 %v180, %v182
        %v184 = vstv %s174
        %v185 = vmul.f32 %v165, %v184
        %v186 = vadd.f32 %v183, %v185
        %v187 = vstv %s178
        %v188 = vadd.f32 %v186, %v187
        %v189 = vstv %s167
        %v190 = vmul.f32 %v161, %v189
        %v191 = vstv %s171
        %v192 = vmul.f32 %v163, %v191
        %v193 = vadd.f32 %v190, %v192
        %v194 = vstv %s175
        %v195 = vmul.f32 %v165, %v194
        %v196 = vadd.f32 %v193, %v195
        %v197 = vadd.f32 %v196, %v187
        %v198 = vstv %s168
        %v199 = vmul.f32 %v161, %v198
        %v200 = vstv %s172
        %v201 = vmul.f32 %v163, %v200
        %v202 = vadd.f32 %v199, %v201
        %v203 = vstv %s176
        %v204 = vmul.f32 %v165, %v203
        %v205 = vadd.f32 %v202, %v204
        %v206 = vadd.f32 %v205, %v187
        %v207 = vstv %s169
        %v208 = vmul.f32 %v161, %v207
        %v209 = vstv %s173
        %v210 = vmul.f32 %v163, %v209
        %v211 = vadd.f32 %v208, %v210
        %v212 = vstv %s177
        %v213 = vmul.f32 %v165, %v212
        %v214 = vadd.f32 %v211, %v213
        %v215 = vadd.f32 %v214, %v187
        %v216 = vlaneseq
        %v217 = vshrl.u32 %v216, 7
        %v218 = vsub.s32 0, %v217
        %v219 = vrot.slane %v188, %v218
        %221 = vbcast.lane.b32.xlu0 %v219, 256
        %v222 = vpop.permute.xlu0 %221
        %s224 = sor.u32 256, 8
        %225 = vbcast.lane.b32.xlu0 %v219, %s224
        %v226 = vpop.permute.xlu0 %225
        %v227 = vlaneseq
        %v228 = vshrl.u32 %v227, 7
        %v229 = vsub.s32 1, %v228
        %v230 = vrot.slane %v188, %v229
        %232 = vbcast.lane.b32.xlu0 %v230, 256
        %v233 = vpop.permute.xlu0 %232
        %s235 = sor.u32 256, 8
        %236 = vbcast.lane.b32.xlu0 %v230, %s235
        %v237 = vpop.permute.xlu0 %236
        %v238 = vlaneseq
        %v239 = vshrl.u32 %v238, 7
        %v240 = vsub.s32 2, %v239
        %v241 = vrot.slane %v188, %v240
        %243 = vbcast.lane.b32.xlu0 %v241, 256
        %v244 = vpop.permute.xlu0 %243
        %s246 = sor.u32 256, 8
        %247 = vbcast.lane.b32.xlu0 %v241, %s246
        %v248 = vpop.permute.xlu0 %247
        %v249 = vlaneseq
        %v250 = vshrl.u32 %v249, 7
        %v251 = vsub.s32 3, %v250
        %v252 = vrot.slane %v188, %v251
        %254 = vbcast.lane.b32.xlu0 %v252, 256
        %v255 = vpop.permute.xlu0 %254
        %s257 = sor.u32 256, 8
        %258 = vbcast.lane.b32.xlu0 %v252, %s257
        %v259 = vpop.permute.xlu0 %258
        %v260 = vlaneseq
        %v261 = vshrl.u32 %v260, 7
        %v262 = vsub.s32 4, %v261
        %v263 = vrot.slane %v188, %v262
        %265 = vbcast.lane.b32.xlu0 %v263, 256
        %v266 = vpop.permute.xlu0 %265
        %s268 = sor.u32 256, 8
        %269 = vbcast.lane.b32.xlu0 %v263, %s268
        %v270 = vpop.permute.xlu0 %269
        %v271 = vlaneseq
        %v272 = vshrl.u32 %v271, 7
        %v273 = vsub.s32 5, %v272
        %v274 = vrot.slane %v188, %v273
        %276 = vbcast.lane.b32.xlu0 %v274, 256
        %v277 = vpop.permute.xlu0 %276
        %s279 = sor.u32 256, 8
        %280 = vbcast.lane.b32.xlu0 %v274, %s279
        %v281 = vpop.permute.xlu0 %280
        %v282 = vlaneseq
        %v283 = vshrl.u32 %v282, 7
        %v284 = vsub.s32 6, %v283
        %v285 = vrot.slane %v188, %v284
        %287 = vbcast.lane.b32.xlu0 %v285, 256
        %v288 = vpop.permute.xlu0 %287
        %s290 = sor.u32 256, 8
        %291 = vbcast.lane.b32.xlu0 %v285, %s290
        %v292 = vpop.permute.xlu0 %291
        %v293 = vlaneseq
        %v294 = vshrl.u32 %v293, 7
        %v295 = vsub.s32 7, %v294
        %v296 = vrot.slane %v188, %v295
        %298 = vbcast.lane.b32.xlu0 %v296, 256
        %v299 = vpop.permute.xlu0 %298
        %s301 = sor.u32 256, 8
        %302 = vbcast.lane.b32.xlu0 %v296, %s301
        %v303 = vpop.permute.xlu0 %302
        %v304 = vlaneseq
        %v305 = vshrl.u32 %v304, 7
        %v306 = vsub.s32 0, %v305
        %v307 = vrot.slane %v197, %v306
        %309 = vbcast.lane.b32.xlu0 %v307, 256
        %v310 = vpop.permute.xlu0 %309
        %s312 = sor.u32 256, 8
        %313 = vbcast.lane.b32.xlu0 %v307, %s312
        %v314 = vpop.permute.xlu0 %313
        %v315 = vlaneseq
        %v316 = vshrl.u32 %v315, 7
        %v317 = vsub.s32 1, %v316
        %v318 = vrot.slane %v197, %v317
        %320 = vbcast.lane.b32.xlu0 %v318, 256
        %v321 = vpop.permute.xlu0 %320
        %s323 = sor.u32 256, 8
        %324 = vbcast.lane.b32.xlu0 %v318, %s323
        %v325 = vpop.permute.xlu0 %324
        %v326 = vlaneseq
        %v327 = vshrl.u32 %v326, 7
        %v328 = vsub.s32 2, %v327
        %v329 = vrot.slane %v197, %v328
        %331 = vbcast.lane.b32.xlu0 %v329, 256
        %v332 = vpop.permute.xlu0 %331
        %s334 = sor.u32 256, 8
        %335 = vbcast.lane.b32.xlu0 %v329, %s334
        %v336 = vpop.permute.xlu0 %335
        %v337 = vlaneseq
        %v338 = vshrl.u32 %v337, 7
        %v339 = vsub.s32 3, %v338
        %v340 = vrot.slane %v197, %v339
        %342 = vbcast.lane.b32.xlu0 %v340, 256
        %v343 = vpop.permute.xlu0 %342
        %s345 = sor.u32 256, 8
        %346 = vbcast.lane.b32.xlu0 %v340, %s345
        %v347 = vpop.permute.xlu0 %346
        %v348 = vlaneseq
        %v349 = vshrl.u32 %v348, 7
        %v350 = vsub.s32 4, %v349
        %v351 = vrot.slane %v197, %v350
        %353 = vbcast.lane.b32.xlu0 %v351, 256
        %v354 = vpop.permute.xlu0 %353
        %s356 = sor.u32 256, 8
        %357 = vbcast.lane.b32.xlu0 %v351, %s356
        %v358 = vpop.permute.xlu0 %357
        %v359 = vlaneseq
        %v360 = vshrl.u32 %v359, 7
        %v361 = vsub.s32 5, %v360
        %v362 = vrot.slane %v197, %v361
        %364 = vbcast.lane.b32.xlu0 %v362, 256
        %v365 = vpop.permute.xlu0 %364
        %s367 = sor.u32 256, 8
        %368 = vbcast.lane.b32.xlu0 %v362, %s367
        %v369 = vpop.permute.xlu0 %368
        %v370 = vlaneseq
        %v371 = vshrl.u32 %v370, 7
        %v372 = vsub.s32 6, %v371
        %v373 = vrot.slane %v197, %v372
        %375 = vbcast.lane.b32.xlu0 %v373, 256
        %v376 = vpop.permute.xlu0 %375
        %s378 = sor.u32 256, 8
        %379 = vbcast.lane.b32.xlu0 %v373, %s378
        %v380 = vpop.permute.xlu0 %379
        %v381 = vlaneseq
        %v382 = vshrl.u32 %v381, 7
        %v383 = vsub.s32 7, %v382
        %v384 = vrot.slane %v197, %v383
        %386 = vbcast.lane.b32.xlu0 %v384, 256
        %v387 = vpop.permute.xlu0 %386
        %s389 = sor.u32 256, 8
        %390 = vbcast.lane.b32.xlu0 %v384, %s389
        %v391 = vpop.permute.xlu0 %390
        %vm392 = vcmask 7168
        %v393 = vsel %vm392, %v222, %v310
        %v394 = vsel %vm392, %v226, %v314
        %v395 = vsel %vm392, %v233, %v321
        %v396 = vsel %vm392, %v237, %v325
        %v397 = vsel %vm392, %v244, %v332
        %v398 = vsel %vm392, %v248, %v336
        %v399 = vsel %vm392, %v255, %v343
        %v400 = vsel %vm392, %v259, %v347
        %v401 = vsel %vm392, %v266, %v354
        %v402 = vsel %vm392, %v270, %v358
        %v403 = vsel %vm392, %v277, %v365
        %v404 = vsel %vm392, %v281, %v369
        %v405 = vsel %vm392, %v288, %v376
        %v406 = vsel %vm392, %v292, %v380
        %v407 = vsel %vm392, %v299, %v387
        %v408 = vsel %vm392, %v303, %v391
        %v409 = vcombine.low %v393, %v397
        %v410 = vcombine.high %v393, %v397
        %v412 = vunpack.c.l.s4 1983009808
        %v413 = vunpack.c.0.s8 %v412
        %v414 = vlaneseq
        %v415 = vshrl.u32 %v414, 7
        %v416 = vsub.s32 %v413, %v415
        %v417 = vrot.slane %v409, %v416
        %v419 = vunpack.c.l.s4 1983009808
        %v420 = vunpack.c.0.s8 %v419
        %v421 = vlaneseq
        %v422 = vshrl.u32 %v421, 7
        %v423 = vsub.s32 %v420, %v422
        %v424 = vrot.slane %v410, %v423
        %v425 = vcombine.low %v395, %v399
        %v426 = vcombine.high %v395, %v399
        %v428 = vunpack.c.l.s4 1983009808
        %v429 = vunpack.c.0.s8 %v428
        %v430 = vlaneseq
        %v431 = vshrl.u32 %v430, 7
        %v432 = vsub.s32 %v429, %v431
        %v433 = vrot.slane %v425, %v432
        %v435 = vunpack.c.l.s4 1983009808
        %v436 = vunpack.c.0.s8 %v435
        %v437 = vlaneseq
        %v438 = vshrl.u32 %v437, 7
        %v439 = vsub.s32 %v436, %v438
        %v440 = vrot.slane %v426, %v439
        %v441 = vcombine.low %v401, %v405
        %v442 = vcombine.high %v401, %v405
        %v444 = vunpack.c.l.s4 1983009808
        %v445 = vunpack.c.0.s8 %v444
        %v446 = vlaneseq
        %v447 = vshrl.u32 %v446, 7
        %v448 = vsub.s32 %v445, %v447
        %v449 = vrot.slane %v441, %v448
        %v451 = vunpack.c.l.s4 1983009808
        %v452 = vunpack.c.0.s8 %v451
        %v453 = vlaneseq
        %v454 = vshrl.u32 %v453, 7
        %v455 = vsub.s32 %v452, %v454
        %v456 = vrot.slane %v442, %v455
        %v457 = vcombine.low %v403, %v407
        %v458 = vcombine.high %v403, %v407
        %v460 = vunpack.c.l.s4 1983009808
        %v461 = vunpack.c.0.s8 %v460
        %v462 = vlaneseq
        %v463 = vshrl.u32 %v462, 7
        %v464 = vsub.s32 %v461, %v463
        %v465 = vrot.slane %v457, %v464
        %v467 = vunpack.c.l.s4 1983009808
        %v468 = vunpack.c.0.s8 %v467
        %v469 = vlaneseq
        %v470 = vshrl.u32 %v469, 7
        %v471 = vsub.s32 %v468, %v470
        %v472 = vrot.slane %v458, %v471
        %v473 = vcombine.low %v417, %v433
        %v474 = vcombine.high %v417, %v433
        %v476 = vunpack.c.l.s4 1934713408
        %v477 = vunpack.c.0.s8 %v476
        %v478 = vlaneseq
        %v479 = vshrl.u32 %v478, 7
        %v480 = vsub.s32 %v477, %v479
        %v481 = vrot.slane %v473, %v480
        %v483 = vunpack.c.l.s4 1934713408
        %v484 = vunpack.c.0.s8 %v483
        %v485 = vlaneseq
        %v486 = vshrl.u32 %v485, 7
        %v487 = vsub.s32 %v484, %v486
        %v488 = vrot.slane %v474, %v487
        %v489 = vcombine.low %v424, %v440
        %v490 = vcombine.high %v424, %v440
        %v492 = vunpack.c.l.s4 1934713408
        %v493 = vunpack.c.0.s8 %v492
        %v494 = vlaneseq
        %v495 = vshrl.u32 %v494, 7
        %v496 = vsub.s32 %v493, %v495
        %v497 = vrot.slane %v489, %v496
        %v499 = vunpack.c.l.s4 1934713408
        %v500 = vunpack.c.0.s8 %v499
        %v501 = vlaneseq
        %v502 = vshrl.u32 %v501, 7
        %v503 = vsub.s32 %v500, %v502
        %v504 = vrot.slane %v490, %v503
        %v505 = vcombine.low %v449, %v465
        %v506 = vcombine.high %v449, %v465
        %v508 = vunpack.c.l.s4 1934713408
        %v509 = vunpack.c.0.s8 %v508
        %v510 = vlaneseq
        %v511 = vshrl.u32 %v510, 7
        %v512 = vsub.s32 %v509, %v511
        %v513 = vrot.slane %v505, %v512
        %v515 = vunpack.c.l.s4 1934713408
        %v516 = vunpack.c.0.s8 %v515
        %v517 = vlaneseq
        %v518 = vshrl.u32 %v517, 7
        %v519 = vsub.s32 %v516, %v518
        %v520 = vrot.slane %v506, %v519
        %v521 = vcombine.low %v456, %v472
        %v522 = vcombine.high %v456, %v472
        %v524 = vunpack.c.l.s4 1934713408
        %v525 = vunpack.c.0.s8 %v524
        %v526 = vlaneseq
        %v527 = vshrl.u32 %v526, 7
        %v528 = vsub.s32 %v525, %v527
        %v529 = vrot.slane %v521, %v528
        %v531 = vunpack.c.l.s4 1934713408
        %v532 = vunpack.c.0.s8 %v531
        %v533 = vlaneseq
        %v534 = vshrl.u32 %v533, 7
        %v535 = vsub.s32 %v532, %v534
        %v536 = vrot.slane %v522, %v535
        %v537 = vcombine.low %v481, %v513
        %v538 = vcombine.high %v481, %v513
        %v539 = vcombine.low %v488, %v520
        %v540 = vcombine.high %v488, %v520
        %v541 = vcombine.low %v497, %v529
        %v542 = vcombine.high %v497, %v529
        %v543 = vcombine.low %v504, %v536
        %v544 = vcombine.high %v504, %v536
        %v545 = vcombine.low %v394, %v398
        %v546 = vcombine.high %v394, %v398
        %v548 = vunpack.c.l.s4 1983009808
        %v549 = vunpack.c.0.s8 %v548
        %v550 = vlaneseq
        %v551 = vshrl.u32 %v550, 7
        %v552 = vsub.s32 %v549, %v551
        %v553 = vrot.slane %v545, %v552
        %v555 = vunpack.c.l.s4 1983009808
        %v556 = vunpack.c.0.s8 %v555
        %v557 = vlaneseq
        %v558 = vshrl.u32 %v557, 7
        %v559 = vsub.s32 %v556, %v558
        %v560 = vrot.slane %v546, %v559
        %v561 = vcombine.low %v396, %v400
        %v562 = vcombine.high %v396, %v400
        %v564 = vunpack.c.l.s4 1983009808
        %v565 = vunpack.c.0.s8 %v564
        %v566 = vlaneseq
        %v567 = vshrl.u32 %v566, 7
        %v568 = vsub.s32 %v565, %v567
        %v569 = vrot.slane %v561, %v568
        %v571 = vunpack.c.l.s4 1983009808
        %v572 = vunpack.c.0.s8 %v571
        %v573 = vlaneseq
        %v574 = vshrl.u32 %v573, 7
        %v575 = vsub.s32 %v572, %v574
        %v576 = vrot.slane %v562, %v575
        %v577 = vcombine.low %v402, %v406
        %v578 = vcombine.high %v402, %v406
        %v580 = vunpack.c.l.s4 1983009808
        %v581 = vunpack.c.0.s8 %v580
        %v582 = vlaneseq
        %v583 = vshrl.u32 %v582, 7
        %v584 = vsub.s32 %v581, %v583
        %v585 = vrot.slane %v577, %v584
        %v587 = vunpack.c.l.s4 1983009808
        %v588 = vunpack.c.0.s8 %v587
        %v589 = vlaneseq
        %v590 = vshrl.u32 %v589, 7
        %v591 = vsub.s32 %v588, %v590
        %v592 = vrot.slane %v578, %v591
        %v593 = vcombine.low %v404, %v408
        %v594 = vcombine.high %v404, %v408
        %v596 = vunpack.c.l.s4 1983009808
        %v597 = vunpack.c.0.s8 %v596
        %v598 = vlaneseq
        %v599 = vshrl.u32 %v598, 7
        %v600 = vsub.s32 %v597, %v599
        %v601 = vrot.slane %v593, %v600
        %v603 = vunpack.c.l.s4 1983009808
        %v604 = vunpack.c.0.s8 %v603
        %v605 = vlaneseq
        %v606 = vshrl.u32 %v605, 7
        %v607 = vsub.s32 %v604, %v606
        %v608 = vrot.slane %v594, %v607
        %v609 = vcombine.low %v553, %v569
        %v610 = vcombine.high %v553, %v569
        %v612 = vunpack.c.l.s4 1934713408
        %v613 = vunpack.c.0.s8 %v612
        %v614 = vlaneseq
        %v615 = vshrl.u32 %v614, 7
        %v616 = vsub.s32 %v613, %v615
        %v617 = vrot.slane %v609, %v616
        %v619 = vunpack.c.l.s4 1934713408
        %v620 = vunpack.c.0.s8 %v619
        %v621 = vlaneseq
        %v622 = vshrl.u32 %v621, 7
        %v623 = vsub.s32 %v620, %v622
        %v624 = vrot.slane %v610, %v623
        %v625 = vcombine.low %v560, %v576
        %v626 = vcombine.high %v560, %v576
        %v628 = vunpack.c.l.s4 1934713408
        %v629 = vunpack.c.0.s8 %v628
        %v630 = vlaneseq
        %v631 = vshrl.u32 %v630, 7
        %v632 = vsub.s32 %v629, %v631
        %v633 = vrot.slane %v625, %v632
        %v635 = vunpack.c.l.s4 1934713408
        %v636 = vunpack.c.0.s8 %v635
        %v637 = vlaneseq
        %v638 = vshrl.u32 %v637, 7
        %v639 = vsub.s32 %v636, %v638
        %v640 = vrot.slane %v626, %v639
        %v641 = vcombine.low %v585, %v601
        %v642 = vcombine.high %v585, %v601
        %v644 = vunpack.c.l.s4 1934713408
        %v645 = vunpack.c.0.s8 %v644
        %v646 = vlaneseq
        %v647 = vshrl.u32 %v646, 7
        %v648 = vsub.s32 %v645, %v647
        %v649 = vrot.slane %v641, %v648
        %v651 = vunpack.c.l.s4 1934713408
        %v652 = vunpack.c.0.s8 %v651
        %v653 = vlaneseq
        %v654 = vshrl.u32 %v653, 7
        %v655 = vsub.s32 %v652, %v654
        %v656 = vrot.slane %v642, %v655
        %v657 = vcombine.low %v592, %v608
        %v658 = vcombine.high %v592, %v608
        %v660 = vunpack.c.l.s4 1934713408
        %v661 = vunpack.c.0.s8 %v660
        %v662 = vlaneseq
        %v663 = vshrl.u32 %v662, 7
        %v664 = vsub.s32 %v661, %v663
        %v665 = vrot.slane %v657, %v664
        %v667 = vunpack.c.l.s4 1934713408
        %v668 = vunpack.c.0.s8 %v667
        %v669 = vlaneseq
        %v670 = vshrl.u32 %v669, 7
        %v671 = vsub.s32 %v668, %v670
        %v672 = vrot.slane %v658, %v671
        %v673 = vcombine.low %v617, %v649
        %v674 = vcombine.high %v617, %v649
        %v675 = vcombine.low %v624, %v656
        %v676 = vcombine.high %v624, %v656
        %v677 = vcombine.low %v633, %v665
        %v678 = vcombine.high %v633, %v665
        %v679 = vcombine.low %v640, %v672
        %v680 = vcombine.high %v640, %v672
        %682 = vrot.lane.b32.xlu0 %v538, 2
        %v683 = vpop.permute.xlu0 %682
        %686 = vrot.lane.b32.xlu0 %v539, 4
        %v687 = vpop.permute.xlu0 %686
        %690 = vrot.lane.b32.xlu0 %v540, 6
        %v691 = vpop.permute.xlu0 %690
        %694 = vrot.lane.b32.xlu0 %v541, 8
        %v695 = vpop.permute.xlu0 %694
        %698 = vrot.lane.b32.xlu0 %v542, 10
        %v699 = vpop.permute.xlu0 %698
        %702 = vrot.lane.b32.xlu0 %v543, 12
        %v703 = vpop.permute.xlu0 %702
        %706 = vrot.lane.b32.xlu0 %v544, 14
        %v707 = vpop.permute.xlu0 %706
        %710 = vrot.lane.b32.xlu0 %v673, 16
        %v711 = vpop.permute.xlu0 %710
        %714 = vrot.lane.b32.xlu0 %v674, 18
        %v715 = vpop.permute.xlu0 %714
        %718 = vrot.lane.b32.xlu0 %v675, 20
        %v719 = vpop.permute.xlu0 %718
        %722 = vrot.lane.b32.xlu0 %v676, 22
        %v723 = vpop.permute.xlu0 %722
        %726 = vrot.lane.b32.xlu0 %v677, 24
        %v727 = vpop.permute.xlu0 %726
        %730 = vrot.lane.b32.xlu0 %v678, 26
        %v731 = vpop.permute.xlu0 %730
        %734 = vrot.lane.b32.xlu0 %v679, 28
        %v735 = vpop.permute.xlu0 %734
        %738 = vrot.lane.b32.xlu0 %v680, 30
        %v739 = vpop.permute.xlu0 %738
        %vm741 = vcmask 15360
        %v742 = vsel %vm741, %v537, %v683
        %vm743 = vcmask 31744
        %v744 = vsel %vm743, %v742, %v687
        %vm745 = vcmask 48128
        %v746 = vsel %vm745, %v744, %v691
        %vm747 = vcmask 64512
        %v748 = vsel %vm747, %v746, %v695
        %vm749 = vcmask 80896
        %v750 = vsel %vm749, %v748, %v699
        %vm751 = vcmask 97280
        %v752 = vsel %vm751, %v750, %v703
        %vm753 = vcmask 113664
        %v754 = vsel %vm753, %v752, %v707
        %vm755 = vcmask 130048
        %v756 = vsel %vm755, %v754, %v711
        %vm757 = vcmask 146432
        %v758 = vsel %vm757, %v756, %v715
        %vm759 = vcmask 162816
        %v760 = vsel %vm759, %v758, %v719
        %vm761 = vcmask 179200
        %v762 = vsel %vm761, %v760, %v723
        %vm763 = vcmask 195584
        %v764 = vsel %vm763, %v762, %v727
        %vm765 = vcmask 211968
        %v766 = vsel %vm765, %v764, %v731
        %vm767 = vcmask 228352
        %v768 = vsel %vm767, %v766, %v735
        %vm769 = vcmask 244736
        %v770 = vsel %vm769, %v768, %v739
        %v771 = vlaneseq
        %v772 = vshrl.u32 %v771, 7
        %v773 = vsub.s32 0, %v772
        %v774 = vrot.slane %v206, %v773
        %776 = vbcast.lane.b32.xlu0 %v774, 256
        %v777 = vpop.permute.xlu0 %776
        %s779 = sor.u32 256, 8
        %780 = vbcast.lane.b32.xlu0 %v774, %s779
        %v781 = vpop.permute.xlu0 %780
        %v782 = vlaneseq
        %v783 = vshrl.u32 %v782, 7
        %v784 = vsub.s32 1, %v783
        %v785 = vrot.slane %v206, %v784
        %787 = vbcast.lane.b32.xlu0 %v785, 256
        %v788 = vpop.permute.xlu0 %787
        %s790 = sor.u32 256, 8
        %791 = vbcast.lane.b32.xlu0 %v785, %s790
        %v792 = vpop.permute.xlu0 %791
        %v793 = vlaneseq
        %v794 = vshrl.u32 %v793, 7
        %v795 = vsub.s32 2, %v794
        %v796 = vrot.slane %v206, %v795
        %798 = vbcast.lane.b32.xlu0 %v796, 256
        %v799 = vpop.permute.xlu0 %798
        %s801 = sor.u32 256, 8
        %802 = vbcast.lane.b32.xlu0 %v796, %s801
        %v803 = vpop.permute.xlu0 %802
        %v804 = vlaneseq
        %v805 = vshrl.u32 %v804, 7
        %v806 = vsub.s32 3, %v805
        %v807 = vrot.slane %v206, %v806
        %809 = vbcast.lane.b32.xlu0 %v807, 256
        %v810 = vpop.permute.xlu0 %809
        %s812 = sor.u32 256, 8
        %813 = vbcast.lane.b32.xlu0 %v807, %s812
        %v814 = vpop.permute.xlu0 %813
        %v815 = vlaneseq
        %v816 = vshrl.u32 %v815, 7
        %v817 = vsub.s32 4, %v816
        %v818 = vrot.slane %v206, %v817
        %820 = vbcast.lane.b32.xlu0 %v818, 256
        %v821 = vpop.permute.xlu0 %820
        %s823 = sor.u32 256, 8
        %824 = vbcast.lane.b32.xlu0 %v818, %s823
        %v825 = vpop.permute.xlu0 %824
        %v826 = vlaneseq
        %v827 = vshrl.u32 %v826, 7
        %v828 = vsub.s32 5, %v827
        %v829 = vrot.slane %v206, %v828
        %831 = vbcast.lane.b32.xlu0 %v829, 256
        %v832 = vpop.permute.xlu0 %831
        %s834 = sor.u32 256, 8
        %835 = vbcast.lane.b32.xlu0 %v829, %s834
        %v836 = vpop.permute.xlu0 %835
        %v837 = vlaneseq
        %v838 = vshrl.u32 %v837, 7
        %v839 = vsub.s32 6, %v838
        %v840 = vrot.slane %v206, %v839
        %842 = vbcast.lane.b32.xlu0 %v840, 256
        %v843 = vpop.permute.xlu0 %842
        %s845 = sor.u32 256, 8
        %846 = vbcast.lane.b32.xlu0 %v840, %s845
        %v847 = vpop.permute.xlu0 %846
        %v848 = vlaneseq
        %v849 = vshrl.u32 %v848, 7
        %v850 = vsub.s32 7, %v849
        %v851 = vrot.slane %v206, %v850
        %853 = vbcast.lane.b32.xlu0 %v851, 256
        %v854 = vpop.permute.xlu0 %853
        %s856 = sor.u32 256, 8
        %857 = vbcast.lane.b32.xlu0 %v851, %s856
        %v858 = vpop.permute.xlu0 %857
        %v859 = vlaneseq
        %v860 = vshrl.u32 %v859, 7
        %v861 = vsub.s32 0, %v860
        %v862 = vrot.slane %v215, %v861
        %864 = vbcast.lane.b32.xlu0 %v862, 256
        %v865 = vpop.permute.xlu0 %864
        %s867 = sor.u32 256, 8
        %868 = vbcast.lane.b32.xlu0 %v862, %s867
        %v869 = vpop.permute.xlu0 %868
        %v870 = vlaneseq
        %v871 = vshrl.u32 %v870, 7
        %v872 = vsub.s32 1, %v871
        %v873 = vrot.slane %v215, %v872
        %875 = vbcast.lane.b32.xlu0 %v873, 256
        %v876 = vpop.permute.xlu0 %875
        %s878 = sor.u32 256, 8
        %879 = vbcast.lane.b32.xlu0 %v873, %s878
        %v880 = vpop.permute.xlu0 %879
        %v881 = vlaneseq
        %v882 = vshrl.u32 %v881, 7
        %v883 = vsub.s32 2, %v882
        %v884 = vrot.slane %v215, %v883
        %886 = vbcast.lane.b32.xlu0 %v884, 256
        %v887 = vpop.permute.xlu0 %886
        %s889 = sor.u32 256, 8
        %890 = vbcast.lane.b32.xlu0 %v884, %s889
        %v891 = vpop.permute.xlu0 %890
        %v892 = vlaneseq
        %v893 = vshrl.u32 %v892, 7
        %v894 = vsub.s32 3, %v893
        %v895 = vrot.slane %v215, %v894
        %897 = vbcast.lane.b32.xlu0 %v895, 256
        %v898 = vpop.permute.xlu0 %897
        %s900 = sor.u32 256, 8
        %901 = vbcast.lane.b32.xlu0 %v895, %s900
        %v902 = vpop.permute.xlu0 %901
        %v903 = vlaneseq
        %v904 = vshrl.u32 %v903, 7
        %v905 = vsub.s32 4, %v904
        %v906 = vrot.slane %v215, %v905
        %908 = vbcast.lane.b32.xlu0 %v906, 256
        %v909 = vpop.permute.xlu0 %908
        %s911 = sor.u32 256, 8
        %912 = vbcast.lane.b32.xlu0 %v906, %s911
        %v913 = vpop.permute.xlu0 %912
        %v914 = vlaneseq
        %v915 = vshrl.u32 %v914, 7
        %v916 = vsub.s32 5, %v915
        %v917 = vrot.slane %v215, %v916
        %919 = vbcast.lane.b32.xlu0 %v917, 256
        %v920 = vpop.permute.xlu0 %919
        %s922 = sor.u32 256, 8
        %923 = vbcast.lane.b32.xlu0 %v917, %s922
        %v924 = vpop.permute.xlu0 %923
        %v925 = vlaneseq
        %v926 = vshrl.u32 %v925, 7
        %v927 = vsub.s32 6, %v926
        %v928 = vrot.slane %v215, %v927
        %930 = vbcast.lane.b32.xlu0 %v928, 256
        %v931 = vpop.permute.xlu0 %930
        %s933 = sor.u32 256, 8
        %934 = vbcast.lane.b32.xlu0 %v928, %s933
        %v935 = vpop.permute.xlu0 %934
        %v936 = vlaneseq
        %v937 = vshrl.u32 %v936, 7
        %v938 = vsub.s32 7, %v937
        %v939 = vrot.slane %v215, %v938
        %941 = vbcast.lane.b32.xlu0 %v939, 256
        %v942 = vpop.permute.xlu0 %941
        %s944 = sor.u32 256, 8
        %945 = vbcast.lane.b32.xlu0 %v939, %s944
        %v946 = vpop.permute.xlu0 %945
        %v947 = vsel %vm392, %v777, %v865
        %v948 = vsel %vm392, %v781, %v869
        %v949 = vsel %vm392, %v788, %v876
        %v950 = vsel %vm392, %v792, %v880
        %v951 = vsel %vm392, %v799, %v887
        %v952 = vsel %vm392, %v803, %v891
        %v953 = vsel %vm392, %v810, %v898
        %v954 = vsel %vm392, %v814, %v902
        %v955 = vsel %vm392, %v821, %v909
        %v956 = vsel %vm392, %v825, %v913
        %v957 = vsel %vm392, %v832, %v920
        %v958 = vsel %vm392, %v836, %v924
        %v959 = vsel %vm392, %v843, %v931
        %v960 = vsel %vm392, %v847, %v935
        %v961 = vsel %vm392, %v854, %v942
        %v962 = vsel %vm392, %v858, %v946
        %v963 = vcombine.low %v947, %v951
        %v964 = vcombine.high %v947, %v951
        %v966 = vunpack.c.l.s4 1983009808
        %v967 = vunpack.c.0.s8 %v966
        %v968 = vlaneseq
        %v969 = vshrl.u32 %v968, 7
        %v970 = vsub.s32 %v967, %v969
        %v971 = vrot.slane %v963, %v970
        %v973 = vunpack.c.l.s4 1983009808
        %v974 = vunpack.c.0.s8 %v973
        %v975 = vlaneseq
        %v976 = vshrl.u32 %v975, 7
        %v977 = vsub.s32 %v974, %v976
        %v978 = vrot.slane %v964, %v977
        %v979 = vcombine.low %v949, %v953
        %v980 = vcombine.high %v949, %v953
        %v982 = vunpack.c.l.s4 1983009808
        %v983 = vunpack.c.0.s8 %v982
        %v984 = vlaneseq
        %v985 = vshrl.u32 %v984, 7
        %v986 = vsub.s32 %v983, %v985
        %v987 = vrot.slane %v979, %v986
        %v989 = vunpack.c.l.s4 1983009808
        %v990 = vunpack.c.0.s8 %v989
        %v991 = vlaneseq
        %v992 = vshrl.u32 %v991, 7
        %v993 = vsub.s32 %v990, %v992
        %v994 = vrot.slane %v980, %v993
        %v995 = vcombine.low %v955, %v959
        %v996 = vcombine.high %v955, %v959
        %v998 = vunpack.c.l.s4 1983009808
        %v999 = vunpack.c.0.s8 %v998
        %v1000 = vlaneseq
        %v1001 = vshrl.u32 %v1000, 7
        %v1002 = vsub.s32 %v999, %v1001
        %v1003 = vrot.slane %v995, %v1002
        %v1005 = vunpack.c.l.s4 1983009808
        %v1006 = vunpack.c.0.s8 %v1005
        %v1007 = vlaneseq
        %v1008 = vshrl.u32 %v1007, 7
        %v1009 = vsub.s32 %v1006, %v1008
        %v1010 = vrot.slane %v996, %v1009
        %v1011 = vcombine.low %v957, %v961
        %v1012 = vcombine.high %v957, %v961
        %v1014 = vunpack.c.l.s4 1983009808
        %v1015 = vunpack.c.0.s8 %v1014
        %v1016 = vlaneseq
        %v1017 = vshrl.u32 %v1016, 7
        %v1018 = vsub.s32 %v1015, %v1017
        %v1019 = vrot.slane %v1011, %v1018
        %v1021 = vunpack.c.l.s4 1983009808
        %v1022 = vunpack.c.0.s8 %v1021
        %v1023 = vlaneseq
        %v1024 = vshrl.u32 %v1023, 7
        %v1025 = vsub.s32 %v1022, %v1024
        %v1026 = vrot.slane %v1012, %v1025
        %v1027 = vcombine.low %v971, %v987
        %v1028 = vcombine.high %v971, %v987
        %v1030 = vunpack.c.l.s4 1934713408
        %v1031 = vunpack.c.0.s8 %v1030
        %v1032 = vlaneseq
        %v1033 = vshrl.u32 %v1032, 7
        %v1034 = vsub.s32 %v1031, %v1033
        %v1035 = vrot.slane %v1027, %v1034
        %v1037 = vunpack.c.l.s4 1934713408
        %v1038 = vunpack.c.0.s8 %v1037
        %v1039 = vlaneseq
        %v1040 = vshrl.u32 %v1039, 7
        %v1041 = vsub.s32 %v1038, %v1040
        %v1042 = vrot.slane %v1028, %v1041
        %v1043 = vcombine.low %v978, %v994
        %v1044 = vcombine.high %v978, %v994
        %v1046 = vunpack.c.l.s4 1934713408
        %v1047 = vunpack.c.0.s8 %v1046
        %v1048 = vlaneseq
        %v1049 = vshrl.u32 %v1048, 7
        %v1050 = vsub.s32 %v1047, %v1049
        %v1051 = vrot.slane %v1043, %v1050
        %v1053 = vunpack.c.l.s4 1934713408
        %v1054 = vunpack.c.0.s8 %v1053
        %v1055 = vlaneseq
        %v1056 = vshrl.u32 %v1055, 7
        %v1057 = vsub.s32 %v1054, %v1056
        %v1058 = vrot.slane %v1044, %v1057
        %v1059 = vcombine.low %v1003, %v1019
        %v1060 = vcombine.high %v1003, %v1019
        %v1062 = vunpack.c.l.s4 1934713408
        %v1063 = vunpack.c.0.s8 %v1062
        %v1064 = vlaneseq
        %v1065 = vshrl.u32 %v1064, 7
        %v1066 = vsub.s32 %v1063, %v1065
        %v1067 = vrot.slane %v1059, %v1066
        %v1069 = vunpack.c.l.s4 1934713408
        %v1070 = vunpack.c.0.s8 %v1069
        %v1071 = vlaneseq
        %v1072 = vshrl.u32 %v1071, 7
        %v1073 = vsub.s32 %v1070, %v1072
        %v1074 = vrot.slane %v1060, %v1073
        %v1075 = vcombine.low %v1010, %v1026
        %v1076 = vcombine.high %v1010, %v1026
        %v1078 = vunpack.c.l.s4 1934713408
        %v1079 = vunpack.c.0.s8 %v1078
        %v1080 = vlaneseq
        %v1081 = vshrl.u32 %v1080, 7
        %v1082 = vsub.s32 %v1079, %v1081
        %v1083 = vrot.slane %v1075, %v1082
        %v1085 = vunpack.c.l.s4 1934713408
        %v1086 = vunpack.c.0.s8 %v1085
        %v1087 = vlaneseq
        %v1088 = vshrl.u32 %v1087, 7
        %v1089 = vsub.s32 %v1086, %v1088
        %v1090 = vrot.slane %v1076, %v1089
        %v1091 = vcombine.low %v1035, %v1067
        %v1092 = vcombine.high %v1035, %v1067
        %v1093 = vcombine.low %v1042, %v1074
        %v1094 = vcombine.high %v1042, %v1074
        %v1095 = vcombine.low %v1051, %v1083
        %v1096 = vcombine.high %v1051, %v1083
        %v1097 = vcombine.low %v1058, %v1090
        %v1098 = vcombine.high %v1058, %v1090
        %v1099 = vcombine.low %v948, %v952
        %v1100 = vcombine.high %v948, %v952
        %v1102 = vunpack.c.l.s4 1983009808
        %v1103 = vunpack.c.0.s8 %v1102
        %v1104 = vlaneseq
        %v1105 = vshrl.u32 %v1104, 7
        %v1106 = vsub.s32 %v1103, %v1105
        %v1107 = vrot.slane %v1099, %v1106
        %v1109 = vunpack.c.l.s4 1983009808
        %v1110 = vunpack.c.0.s8 %v1109
        %v1111 = vlaneseq
        %v1112 = vshrl.u32 %v1111, 7
        %v1113 = vsub.s32 %v1110, %v1112
        %v1114 = vrot.slane %v1100, %v1113
        %v1115 = vcombine.low %v950, %v954
        %v1116 = vcombine.high %v950, %v954
        %v1118 = vunpack.c.l.s4 1983009808
        %v1119 = vunpack.c.0.s8 %v1118
        %v1120 = vlaneseq
        %v1121 = vshrl.u32 %v1120, 7
        %v1122 = vsub.s32 %v1119, %v1121
        %v1123 = vrot.slane %v1115, %v1122
        %v1125 = vunpack.c.l.s4 1983009808
        %v1126 = vunpack.c.0.s8 %v1125
        %v1127 = vlaneseq
        %v1128 = vshrl.u32 %v1127, 7
        %v1129 = vsub.s32 %v1126, %v1128
        %v1130 = vrot.slane %v1116, %v1129
        %v1131 = vcombine.low %v956, %v960
        %v1132 = vcombine.high %v956, %v960
        %v1134 = vunpack.c.l.s4 1983009808
        %v1135 = vunpack.c.0.s8 %v1134
        %v1136 = vlaneseq
        %v1137 = vshrl.u32 %v1136, 7
        %v1138 = vsub.s32 %v1135, %v1137
        %v1139 = vrot.slane %v1131, %v1138
        %v1141 = vunpack.c.l.s4 1983009808
        %v1142 = vunpack.c.0.s8 %v1141
        %v1143 = vlaneseq
        %v1144 = vshrl.u32 %v1143, 7
        %v1145 = vsub.s32 %v1142, %v1144
        %v1146 = vrot.slane %v1132, %v1145
        %v1147 = vcombine.low %v958, %v962
        %v1148 = vcombine.high %v958, %v962
        %v1150 = vunpack.c.l.s4 1983009808
        %v1151 = vunpack.c.0.s8 %v1150
        %v1152 = vlaneseq
        %v1153 = vshrl.u32 %v1152, 7
        %v1154 = vsub.s32 %v1151, %v1153
        %v1155 = vrot.slane %v1147, %v1154
        %v1157 = vunpack.c.l.s4 1983009808
        %v1158 = vunpack.c.0.s8 %v1157
        %v1159 = vlaneseq
        %v1160 = vshrl.u32 %v1159, 7
        %v1161 = vsub.s32 %v1158, %v1160
        %v1162 = vrot.slane %v1148, %v1161
        %v1163 = vcombine.low %v1107, %v1123
        %v1164 = vcombine.high %v1107, %v1123
        %v1166 = vunpack.c.l.s4 1934713408
        %v1167 = vunpack.c.0.s8 %v1166
        %v1168 = vlaneseq
        %v1169 = vshrl.u32 %v1168, 7
        %v1170 = vsub.s32 %v1167, %v1169
        %v1171 = vrot.slane %v1163, %v1170
        %v1173 = vunpack.c.l.s4 1934713408
        %v1174 = vunpack.c.0.s8 %v1173
        %v1175 = vlaneseq
        %v1176 = vshrl.u32 %v1175, 7
        %v1177 = vsub.s32 %v1174, %v1176
        %v1178 = vrot.slane %v1164, %v1177
        %v1179 = vcombine.low %v1114, %v1130
        %v1180 = vcombine.high %v1114, %v1130
        %v1182 = vunpack.c.l.s4 1934713408
        %v1183 = vunpack.c.0.s8 %v1182
        %v1184 = vlaneseq
        %v1185 = vshrl.u32 %v1184, 7
        %v1186 = vsub.s32 %v1183, %v1185
        %v1187 = vrot.slane %v1179, %v1186
        %v1189 = vunpack.c.l.s4 1934713408
        %v1190 = vunpack.c.0.s8 %v1189
        %v1191 = vlaneseq
        %v1192 = vshrl.u32 %v1191, 7
        %v1193 = vsub.s32 %v1190, %v1192
        %v1194 = vrot.slane %v1180, %v1193
        %v1195 = vcombine.low %v1139, %v1155
        %v1196 = vcombine.high %v1139, %v1155
        %v1198 = vunpack.c.l.s4 1934713408
        %v1199 = vunpack.c.0.s8 %v1198
        %v1200 = vlaneseq
        %v1201 = vshrl.u32 %v1200, 7
        %v1202 = vsub.s32 %v1199, %v1201
        %v1203 = vrot.slane %v1195, %v1202
        %v1205 = vunpack.c.l.s4 1934713408
        %v1206 = vunpack.c.0.s8 %v1205
        %v1207 = vlaneseq
        %v1208 = vshrl.u32 %v1207, 7
        %v1209 = vsub.s32 %v1206, %v1208
        %v1210 = vrot.slane %v1196, %v1209
        %v1211 = vcombine.low %v1146, %v1162
        %v1212 = vcombine.high %v1146, %v1162
        %v1214 = vunpack.c.l.s4 1934713408
        %v1215 = vunpack.c.0.s8 %v1214
        %v1216 = vlaneseq
        %v1217 = vshrl.u32 %v1216, 7
        %v1218 = vsub.s32 %v1215, %v1217
        %v1219 = vrot.slane %v1211, %v1218
        %v1221 = vunpack.c.l.s4 1934713408
        %v1222 = vunpack.c.0.s8 %v1221
        %v1223 = vlaneseq
        %v1224 = vshrl.u32 %v1223, 7
        %v1225 = vsub.s32 %v1222, %v1224
        %v1226 = vrot.slane %v1212, %v1225
        %v1227 = vcombine.low %v1171, %v1203
        %v1228 = vcombine.high %v1171, %v1203
        %v1229 = vcombine.low %v1178, %v1210
        %v1230 = vcombine.high %v1178, %v1210
        %v1231 = vcombine.low %v1187, %v1219
        %v1232 = vcombine.high %v1187, %v1219
        %v1233 = vcombine.low %v1194, %v1226
        %v1234 = vcombine.high %v1194, %v1226
        %1236 = vrot.lane.b32.xlu0 %v1092, 2
        %v1237 = vpop.permute.xlu0 %1236
        %1240 = vrot.lane.b32.xlu0 %v1093, 4
        %v1241 = vpop.permute.xlu0 %1240
        %1244 = vrot.lane.b32.xlu0 %v1094, 6
        %v1245 = vpop.permute.xlu0 %1244
        %1248 = vrot.lane.b32.xlu0 %v1095, 8
        %v1249 = vpop.permute.xlu0 %1248
        %1252 = vrot.lane.b32.xlu0 %v1096, 10
        %v1253 = vpop.permute.xlu0 %1252
        %1256 = vrot.lane.b32.xlu0 %v1097, 12
        %v1257 = vpop.permute.xlu0 %1256
        %1260 = vrot.lane.b32.xlu0 %v1098, 14
        %v1261 = vpop.permute.xlu0 %1260
        %1264 = vrot.lane.b32.xlu0 %v1227, 16
        %v1265 = vpop.permute.xlu0 %1264
        %1268 = vrot.lane.b32.xlu0 %v1228, 18
        %v1269 = vpop.permute.xlu0 %1268
        %1272 = vrot.lane.b32.xlu0 %v1229, 20
        %v1273 = vpop.permute.xlu0 %1272
        %1276 = vrot.lane.b32.xlu0 %v1230, 22
        %v1277 = vpop.permute.xlu0 %1276
        %1280 = vrot.lane.b32.xlu0 %v1231, 24
        %v1281 = vpop.permute.xlu0 %1280
        %1284 = vrot.lane.b32.xlu0 %v1232, 26
        %v1285 = vpop.permute.xlu0 %1284
        %1288 = vrot.lane.b32.xlu0 %v1233, 28
        %v1289 = vpop.permute.xlu0 %1288
        %1292 = vrot.lane.b32.xlu0 %v1234, 30
        %v1293 = vpop.permute.xlu0 %1292
        %v1295 = vsel %vm741, %v1091, %v1237
        %v1296 = vsel %vm743, %v1295, %v1241
        %v1297 = vsel %vm745, %v1296, %v1245
        %v1298 = vsel %vm747, %v1297, %v1249
        %v1299 = vsel %vm749, %v1298, %v1253
        %v1300 = vsel %vm751, %v1299, %v1257
        %v1301 = vsel %vm753, %v1300, %v1261
        %v1302 = vsel %vm755, %v1301, %v1265
        %v1303 = vsel %vm757, %v1302, %v1269
        %v1304 = vsel %vm759, %v1303, %v1273
        %v1305 = vsel %vm761, %v1304, %v1277
        %v1306 = vsel %vm763, %v1305, %v1281
        %v1307 = vsel %vm765, %v1306, %v1285
        %v1308 = vsel %vm767, %v1307, %v1289
        %v1309 = vsel %vm769, %v1308, %v1293
        %1311 = vrot.lane.b32.xlu0 %v1309, 32
        %v1312 = vpop.permute.xlu0 %1311
        %vm1314 = vcmask 261120
        %v1315 = vsel %vm1314, %v770, %v1312
        %vm1316 = vcmask 523264
        %1317 = vst.msk [vmem:[%s160] sm:$0xff] %vm1316, %v1315
        %s1318 = scalar_lea.vmem %s160, 8 [#allocation8]
        %1319 = vst.msk [vmem:[%s1318] sm:$0xff] %vm1316, %v1315
        %s1320 = scalar_lea.vmem %s160, 16 [#allocation8]
        %1321 = vst.msk [vmem:[%s1320] sm:$0xff] %vm1316, %v1315
        %s1322 = sand.u32 %s77, 1
        %s1323 = scalar_lea.sflag [#allocation7], %s1322
        %s1324 = sand.u32 %s77, 1
        %s1325 = smul.addr %s1324, 24
        %s1326 = scalar_lea.vmem [#allocation8], %s1325
        // Predicated region
        $region29: #{tpu_custom_call.1} parent=23 // pred_check
          %p1327 = pneg %p87
        $region30: #{tpu_custom_call.1} parent=23 // pred_check_branch
          %1329 = sbr.rel (%p1327) target = $region32
        $region31: #{tpu_custom_call.1} parent=23 // pred_region
          %s1331 = ssub.s32 384, 384
          %1332 = vsyncadd %s1323, %s1331
          %s1333 = smul.addr %s31, 6
          %s1334 = sadd.s32 %s32, %s1333
          %s1335 = smul.addr %s1334, 128
          %s1336 = scalar_lea.hbm %s3, %s1335
          %s1337 = sshll.u32 %s1326, 4
          %s1338 = int_to_ptr.vmem [resolvable:$true] %s1337
          %1343 = dma.vmem_to_hbm [thread:$0]  %s1338, 384, %s1336, %s1323, 128, 256, 8
        $region32: #{tpu_custom_call.1} parent=23 // pred_fallthru
          _
      $region24: #{tpu_custom_call.1} parent=5 // pred_fallthru
        _
      %p1344 = scmp.le.s32.totalorder 2, %s22
      // Predicated region
      $region33: #{tpu_custom_call.1} parent=5 // pred_check
        %p1345 = pneg %p1344
      $region34: #{tpu_custom_call.1} parent=5 // pred_check_branch
        %1347 = sbr.rel (%p1345) target = $region36
      $region35: #{tpu_custom_call.1} parent=5 // pred_region
        %s1348 = ssub.s32 %s22, 2
        // Predicated region
        $region37: #{tpu_custom_call.1} parent=35 // pred_check
          %p1349 = pneg %p93
        $region38: #{tpu_custom_call.1} parent=35 // pred_check_branch
          %1351 = sbr.rel (%p1349) target = $region40
        $region39: #{tpu_custom_call.1} parent=35 // pred_region
          %s1352 = sand.u32 %s78, 1
          %s1353 = scalar_lea.sflag [#allocation7], %s1352
          %s1354 = sand.u32 %s78, 1
          %s1355 = smul.addr %s1354, 24
          %s1356 = scalar_lea.vmem [#allocation8], %s1355
          %1357 = dma.done %s1353, 384
        $region40: #{tpu_custom_call.1} parent=35 // pred_fallthru
          _
      $region36: #{tpu_custom_call.1} parent=5 // pred_fallthru
        _
    $region6: #{tpu_custom_call.1} parent=1 // loop_footer
      %s26 = sadd.s32 1, %s22
    $region7: #{tpu_custom_call.1} parent=1 // loop_footer_branch
      %21 = sbr.rel target = $region3
    $region8: #{tpu_custom_call.1} parent=1 // loop_exit
      _
    %1358 = vsyncpa [#allocation6], 1
    %s1359 = scalar_lea.sflag [#allocation6], 1
    %1360 = vsyncpa %s1359, 1
    %1361 = vsyncpa [#allocation7], 1
    %s1362 = scalar_lea.sflag [#allocation7], 1
    %1363 = vsyncpa %s1362, 1

</llo_original>
